<compile_context>
chip_gen: v5e
topology: v5e:2x2
jax: 0.10.0
libtpu: 0.0.40
codegen_flags: <defaults>
</compile_context>

<pallas_src>
import functools
import math

import jax
import jax.numpy as jnp
from jax import lax
from jax.experimental import pallas as pl
from jax.experimental.pallas import tpu as pltpu


def _gumbel_softmax_kernel(x_ref, u_ref, o_ref, *,
                           hard: bool, inv_temperature: float,
                           eps: float = 1e-10):
    """One (N, TILE_COLS) tile: Gumbel noise + softmax / hard one-hot over axis 0."""
    x = x_ref[...].astype(jnp.float32)          # (N, TC) logits (cast in-kernel)
    u = u_ref[...].astype(jnp.float32)          # (N, TC) uniform [0, 1)

    # Gumbel(0, 1) noise, exact PyTorch formula: -log(eps - log(u + eps)).
    g = -jnp.log(eps - jnp.log(u + eps))
    z = (x + g) * inv_temperature               # temperature == 1 in forward()

    n = z.shape[0]
    m = jnp.max(z, axis=0, keepdims=True)       # (1, TC)

    if hard:
        # argmax(z) == argmax(softmax(z)): skip exp/sum/normalize entirely and
        # build the one-hot straight from z (first max index wins, like torch.max).
        iota = lax.broadcasted_iota(jnp.int32, z.shape, 0)
        idx = jnp.min(jnp.where(z == m, iota, n), axis=0, keepdims=True)
        y = (iota == idx).astype(jnp.float32)
    else:
        e = jnp.exp(z - m)
        s = jnp.sum(e, axis=0, keepdims=True)
        y = e / s                               # divide cost negligible vs exp/log chain

    o_ref[...] = y.astype(o_ref.dtype)


def gumble_softmax_forward(logits, key, temp: float = 1.0,
                           training: bool = False, force_hard: bool = False,
                           tile_cols: int = 2048):
    """Mirrors GumbleSoftmax.forward: soft sample while training (and not force_hard),
    hard (straight-through one-hot) sample otherwise.
    Note: the PyTorch forward always uses temperature=1, ignoring `temp`."""
    del temp
    hard = (not training) or force_hard
    temperature = 1.0

    orig_shape = logits.shape
    n = orig_shape[-1]
    r = int(math.prod(orig_shape[:-1]))

    # Lane-dense layout: classes -> sublanes, rows -> lanes.  Native dtype passes
    # straight through the BlockSpec; the f32 upcast happens inside the kernel.
    xt = logits.reshape(r, n).T                 # (N, R)

    # Large lane tile (multiple of 128), capped at the padded problem size.
    # (16, 2048) f32 blocks are 128 KiB each -> trivially inside VMEM on v5e/v6e/v7x.
    tile_cols = max(128, (int(tile_cols) // 128) * 128)
    tile_cols = min(tile_cols, pl.cdiv(r, 128) * 128)
    r_pad = pl.cdiv(r, tile_cols) * tile_cols
    if r_pad != r:
        xt = jnp.pad(xt, ((0, 0), (0, r_pad - r)))

    # Uniform noise generated directly in the padded (N, R) layout (no transpose).
    u = jax.random.uniform(key, (n, r_pad), dtype=jnp.float32)

    kernel = functools.partial(_gumbel_softmax_kernel, hard=hard,
                               inv_temperature=float(1.0 / temperature))

    out = pl.pallas_call(
        kernel,
        out_shape=jax.ShapeDtypeStruct((n, r_pad), logits.dtype),
        grid_spec=pltpu.PrefetchScalarGridSpec(
            num_scalar_prefetch=0,
            grid=(r_pad // tile_cols,),
            in_specs=[pl.BlockSpec((n, tile_cols), lambda i: (0, i)),
                      pl.BlockSpec((n, tile_cols), lambda i: (0, i))],
            out_specs=pl.BlockSpec((n, tile_cols), lambda i: (0, i)),
        ),
        compiler_params=pltpu.CompilerParams(
            # No in-kernel state -> grid steps are independent; "parallel" lets
            # v7x shard the grid across both TensorCores (neutral on v5e/v6e).
            dimension_semantics=("parallel",),
        ),
    )(xt, u)

    return out[:, :r].T.reshape(orig_shape)


if __name__ == "__main__":
    root = jax.random.PRNGKey(0)
    k_logits, k_hard, k_soft = jax.random.split(root, 3)

    # NCHW-style logits; the class axis is the last axis (W = 16), as in the module.
    logits = jax.random.normal(k_logits, (2, 4, 16, 16), dtype=jnp.float32)

    # Eval path (default): hard one-hot straight-through sample.
    y_hard = jax.block_until_ready(
        gumble_softmax_forward(logits, k_hard, training=False))
    # Training path: soft Gumbel-softmax sample.
    y_soft = jax.block_until_ready(
        gumble_softmax_forward(logits, k_soft, training=True))

    assert y_hard.shape == logits.shape and y_soft.shape == logits.shape

    # Hard output: one-hot rows (values in {0, 1}, each row sums to 1).
    assert bool(jnp.all(jnp.isclose(jnp.sum(y_hard, axis=-1), 1.0)))
    assert bool(jnp.all((y_hard == 0.0) | (y_hard == 1.0)))

    # Soft output: a probability distribution over the last axis.
    assert bool(jnp.all(jnp.isclose(jnp.sum(y_soft, axis=-1), 1.0, atol=1e-4)))
    assert bool(jnp.all(y_soft >= 0.0))

    print("KERNEL_OK")
</pallas_src>

<mosaic_0001>
module attributes {stable_mosaic.version = 11 : i64} {
  func.func @_gumbel_softmax_kernel(%arg0: i32, %arg1: memref<16x128xf32, #tpu.memory_space<vmem>>, %arg2: memref<16x128xf32, #tpu.memory_space<vmem>>, %arg3: memref<16x128xf32, #tpu.memory_space<vmem>>) attributes {dimension_semantics = [#tpu.dimension_semantics<parallel>], iteration_bounds = array<i64: 1>, scalar_prefetch = 0 : i64, scratch_operands = 0 : i64, tpu.core_type = #tpu.core_type<tc>, window_params = [{transform_indices = @transform_0, window_bounds = array<i64: 16, 128>}, {transform_indices = @transform_1, window_bounds = array<i64: 16, 128>}, {transform_indices = @transform_2, window_bounds = array<i64: 16, 128>}]} {
    %c0 = arith.constant 0 : index
    %c0_0 = arith.constant 0 : index
    %0 = vector.load %arg1[%c0, %c0_0] : memref<16x128xf32, #tpu.memory_space<vmem>>, vector<16x128xf32>
    %c0_1 = arith.constant 0 : index
    %c0_2 = arith.constant 0 : index
    %1 = vector.load %arg2[%c0_1, %c0_2] : memref<16x128xf32, #tpu.memory_space<vmem>>, vector<16x128xf32>
    %cst = arith.constant 1.000000e-10 : f32
    %2 = vector.broadcast %cst : f32 to vector<16x128xf32>
    %3 = arith.addf %1, %2 : vector<16x128xf32>
    %4 = math.log %3 : vector<16x128xf32>
    %cst_3 = arith.constant 1.000000e-10 : f32
    %5 = vector.broadcast %cst_3 : f32 to vector<16x128xf32>
    %6 = arith.subf %5, %4 : vector<16x128xf32>
    %7 = math.log %6 : vector<16x128xf32>
    %cst_4 = arith.constant 0.000000e+00 : f32
    %8 = vector.broadcast %cst_4 : f32 to vector<16x128xf32>
    %9 = arith.subf %8, %7 : vector<16x128xf32>
    %10 = arith.addf %0, %9 : vector<16x128xf32>
    %cst_5 = arith.constant 1.000000e+00 : f32
    %11 = vector.broadcast %cst_5 : f32 to vector<16x128xf32>
    %12 = arith.mulf %10, %11 : vector<16x128xf32>
    %cst_6 = arith.constant dense<0xFF800000> : vector<128xf32>
    %13 = vector.multi_reduction <maximumf>, %12, %cst_6 [0] : vector<16x128xf32> to vector<128xf32>
    %14 = vector.shape_cast %13 : vector<128xf32> to vector<1x128xf32>
    %15 = tpu.iota {dimensions = array<i32: 0>} : vector<16x128xi32>
    %16 = vector.broadcast %14 : vector<1x128xf32> to vector<16x128xf32>
    %17 = arith.cmpf oeq, %12, %16 : vector<16x128xf32>
    %c16_i32 = arith.constant 16 : i32
    %18 = vector.broadcast %c16_i32 : i32 to vector<16x128xi32>
    %19 = arith.select %17, %15, %18 : vector<16x128xi1>, vector<16x128xi32>
    %cst_7 = arith.constant dense<2147483647> : vector<128xi32>
    %20 = vector.multi_reduction <minsi>, %19, %cst_7 [0] : vector<16x128xi32> to vector<128xi32>
    %21 = vector.shape_cast %20 : vector<128xi32> to vector<1x128xi32>
    %22 = vector.broadcast %21 : vector<1x128xi32> to vector<16x128xi32>
    %23 = arith.cmpi eq, %15, %22 : vector<16x128xi32>
    %24 = arith.extui %23 : vector<16x128xi1> to vector<16x128xi32>
    %25 = arith.sitofp %24 : vector<16x128xi32> to vector<16x128xf32>
    %c0_8 = arith.constant 0 : index
    %c0_9 = arith.constant 0 : index
    %26 = vector.load %arg3[%c0_8, %c0_9] : memref<16x128xf32, #tpu.memory_space<vmem>>, vector<16x128xf32>
    tpu.vector_store %arg3[%c0_8, %c0_9], %25 {strides = array<i32>} : memref<16x128xf32, #tpu.memory_space<vmem>>, vector<16x128xf32>,
    return
  }
  func.func @transform_0(%arg0: i32) -> (i32, i32) {
    %c0_i32 = arith.constant 0 : i32
    %c0_i32_0 = arith.constant 0 : i32
    return %c0_i32, %arg0 : i32, i32
  }
  func.func @transform_1(%arg0: i32) -> (i32, i32) {
    %c0_i32 = arith.constant 0 : i32
    %c0_i32_0 = arith.constant 0 : i32
    return %c0_i32, %arg0 : i32, i32
  }
  func.func @transform_2(%arg0: i32) -> (i32, i32) {
    %c0_i32 = arith.constant 0 : i32
    %c0_i32_0 = arith.constant 0 : i32
    return %c0_i32, %arg0 : i32, i32
  }
}

</mosaic_0001>

<llo_original>
// kernel: tpu_custom_call.1
$region0: #{tpu_custom_call.1}
  #allocation0 [shape = 'u32[]', space=smem, size = 0x4, offset = 0x4, fixed_abs, tag = 'smem constant byte address 0x4 - core index']
  #allocation1 [shape = 'u32[72,128]{1,0:T(1,128)}', space=vmem, size = 0x9000, scoped, tag = 'internal scratch']
  %s0 = inlined_call_operand.hbm [shape: f32[16,128], index: 0, kind: input, shape index: {}]
  %s1 = inlined_call_operand.hbm [shape: f32[16,128], index: 1, kind: input, shape index: {}]
  %s2 = inlined_call_operand.hbm [shape: f32[16,128], index: 2, kind: output, shape index: {}]
  %s3 = sld [smem:[#allocation0]]
  $region26: #{tpu_custom_call.1} parent=0
    _
  %s5 = ssub.s32 1, %s3
  %s6 = scalar_select 0, %s5, %s3
  $region1: #{tpu_custom_call.1} parent=0
    #allocation2 [shape = 'u8[8192]{0}', space=vmem, size = 0x2000, scoped, tag = 'input window, operand 0, single buffered']
    #allocation3 [shape = 's32[1]{0}', space=sflag, size = 0x4, scoped, tag = 'scoped memory for tpu_custom_call.1']
    #allocation4 [shape = 's32[1]{0}', space=sflag, size = 0x4, scoped, tag = 'scoped memory for tpu_custom_call.1']
    #allocation5 [shape = 'u8[8192]{0}', space=vmem, size = 0x2000, scoped, tag = 'input window, operand 1, single buffered']
    #allocation6 [shape = 's32[1]{0}', space=sflag, size = 0x4, scoped, tag = 'scoped memory for tpu_custom_call.1']
    #allocation7 [shape = 'u8[8192]{0}', space=vmem, size = 0x2000, scoped, tag = 'output window, operand 0, single buffered']
    %7 = vsyncpa [#allocation3], 0
    %8 = vsyncpa [#allocation6], 0
    %9 = vsyncpa [#allocation4], 0
    // Predicated region
    $region2: #{tpu_custom_call.1} parent=1 // pred_check
      _
    $region3: #{tpu_custom_call.1} parent=1 // pred_check_branch
      %11 = sbr.rel (0) target = $region5
    $region4: #{tpu_custom_call.1} parent=1 // pred_region
      %13 = vsyncadd [#allocation3], 0
      %s14 = sshll.u32 %s0, 4
      %s15 = int_to_ptr.hbm [resolvable:$true] %s14
      %s16 = sshll.u32 [#allocation2], 4
      %s17 = int_to_ptr.vmem [resolvable:$true] %s16
      %22 = dma.hbm_to_vmem [thread:$0]  %s15, 256, %s17, [#allocation3], 128, 128, 8
    $region5: #{tpu_custom_call.1} parent=1 // pred_fallthru
      _
    // Predicated region
    $region6: #{tpu_custom_call.1} parent=1 // pred_check
      _
    $region7: #{tpu_custom_call.1} parent=1 // pred_check_branch
      %24 = sbr.rel (0) target = $region9
    $region8: #{tpu_custom_call.1} parent=1 // pred_region
      %26 = vsyncadd [#allocation6], 0
      %s27 = sshll.u32 %s1, 4
      %s28 = int_to_ptr.hbm [resolvable:$true] %s27
      %s29 = sshll.u32 [#allocation5], 4
      %s30 = int_to_ptr.vmem [resolvable:$true] %s29
      %35 = dma.hbm_to_vmem [thread:$0]  %s28, 256, %s30, [#allocation6], 128, 128, 8
    $region9: #{tpu_custom_call.1} parent=1 // pred_fallthru
      _
    // Predicated region
    $region10: #{tpu_custom_call.1} parent=1 // pred_check
      _
    $region11: #{tpu_custom_call.1} parent=1 // pred_check_branch
      %37 = sbr.rel (0) target = $region13
    $region12: #{tpu_custom_call.1} parent=1 // pred_region
      %39 = dma.done [#allocation3], 256
    $region13: #{tpu_custom_call.1} parent=1 // pred_fallthru
      _
    // Predicated region
    $region14: #{tpu_custom_call.1} parent=1 // pred_check
      _
    $region15: #{tpu_custom_call.1} parent=1 // pred_check_branch
      %41 = sbr.rel (0) target = $region17
    $region16: #{tpu_custom_call.1} parent=1 // pred_region
      %43 = dma.done [#allocation6], 256
    $region17: #{tpu_custom_call.1} parent=1 // pred_fallthru
      _
    %v44 = vld [vmem:[#allocation2] sm:$0xff]
    %v45 = vld [vmem:[#allocation2 + $0x8] sm:$0xff]
    %v46 = vld [vmem:[#allocation5] sm:$0xff]
    %v47 = vld [vmem:[#allocation5 + $0x8] sm:$0xff]
    %v48 = vadd.f32 %v46, 1e-10
    %v49 = vadd.f32 %v47, 1e-10
    %v50 = vlog2.pop %v48
    %v51 = vmul.f32 %v50, 0.6931472
    %v52 = vlog2.pop %v49
    %v53 = vmul.f32 %v52, 0.6931472
    %v54 = vsub.f32 1e-10, %v51
    %v55 = vsub.f32 1e-10, %v53
    %v56 = vlog2.pop %v54
    %v57 = vmul.f32 %v56, 0.6931472
    %v58 = vlog2.pop %v55
    %v59 = vmul.f32 %v58, 0.6931472
    %v60 = vsub.f32 0.0, %v57
    %v61 = vsub.f32 0.0, %v59
    %v62 = vadd.f32 %v44, %v60
    %v63 = vadd.f32 %v45, %v61
    %v64 = vmax.f32 %v62, %v63
    %v65 = vrot.slane %v64, 4
    %v66 = vmax.f32 %v64, %v65
    %v67 = vrot.slane %v66, 2
    %v68 = vmax.f32 %v66, %v67
    %v69 = vrot.slane %v68, 1
    %v70 = vmax.f32 %v68, %v69
    %v71 = vlaneseq
    %v72 = vshrl.u32 %v71, 7
    %v73 = vadd.s32 %v72, 8
    %vm74 = vcmp.eq.f32.partialorder %v62, %v70
    %vm75 = vcmp.eq.f32.partialorder %v63, %v70
    %v76 = vsel %vm74, %v72, 16
    %v77 = vsel %vm75, %v73, 16
    %vm78 = vcmp.lt.s32.totalorder %v76, %v77
    %v79 = vsel %vm78, %v76, %v77
    %v80 = vrot.slane %v79, 4
    %vm81 = vcmp.lt.s32.totalorder %v79, %v80
    %v82 = vsel %vm81, %v79, %v80
    %v83 = vrot.slane %v82, 2
    %vm84 = vcmp.lt.s32.totalorder %v82, %v83
    %v85 = vsel %vm84, %v82, %v83
    %v86 = vrot.slane %v85, 1
    %vm87 = vcmp.lt.s32.totalorder %v85, %v86
    %v88 = vsel %vm87, %v85, %v86
    %vm89 = vcmp.eq.s32.totalorder %v72, %v88
    %vm90 = vcmp.eq.s32.totalorder %v73, %v88
    %v91 = vsel %vm89, 1, 0
    %v92 = vsel %vm90, 1, 0
    %v93 = vcvt.s32.f32 %v91
    %v94 = vcvt.s32.f32 %v92
    %95 = vst [vmem:[#allocation7] sm:$0xff] %v93
    %96 = vst [vmem:[#allocation7 + $0x8] sm:$0xff] %v94
    // Predicated region
    $region18: #{tpu_custom_call.1} parent=1 // pred_check
      _
    $region19: #{tpu_custom_call.1} parent=1 // pred_check_branch
      %98 = sbr.rel (0) target = $region21
    $region20: #{tpu_custom_call.1} parent=1 // pred_region
      %100 = vsyncadd [#allocation4], 0
      %s101 = sshll.u32 [#allocation7], 4
      %s102 = int_to_ptr.vmem [resolvable:$true] %s101
      %s103 = sshll.u32 %s2, 4
      %s104 = int_to_ptr.hbm [resolvable:$true] %s103
      %109 = dma.vmem_to_hbm [thread:$0]  %s102, 256, %s104, [#allocation4], 128, 128, 8
    $region21: #{tpu_custom_call.1} parent=1 // pred_fallthru
      _
    // Predicated region
    $region22: #{tpu_custom_call.1} parent=1 // pred_check
      _
    $region23: #{tpu_custom_call.1} parent=1 // pred_check_branch
      %111 = sbr.rel (0) target = $region25
    $region24: #{tpu_custom_call.1} parent=1 // pred_region
      %113 = dma.done [#allocation4], 256
    $region25: #{tpu_custom_call.1} parent=1 // pred_fallthru
      _
    %114 = vsyncpa [#allocation3], 1
    %115 = vsyncpa [#allocation6], 1
    %116 = vsyncpa [#allocation4], 1

</llo_original>
